<compile_context>
chip_gen: v7x
topology: tpu7x:2x2x1
jax: 0.10.0
libtpu: 0.0.40
codegen_flags: <defaults>
</compile_context>

<pallas_src>
import jax
import jax.numpy as jnp
from jax.experimental import pallas as pl
from jax.experimental.pallas import tpu as pltpu


def _round_up(x, m):
    return ((x + m - 1) // m) * m


def kancd_kernel(se_ref, edisc_ref, q_ref, kn_t_ref,
                 w1_t_ref, b1_ref, w2_t_ref, b2_ref, w3_ref, b3_ref,
                 out_ref):
    """One batch tile of the KaNCD dense hot path.

    se_ref   : (2*TB, D)  rows [0:TB] = student emb, rows [TB:2*TB] = exercise emb
    edisc_ref: (TB, 1)
    q_ref    : (TB, K)
    kn_t_ref : (D, K)     knowledge_emb, pre-transposed in the wrapper
    w1_t_ref : (K, H1)    |fc1.weight|.T  (PosLinear folded in wrapper)
    b1_ref   : (1, H1)
    w2_t_ref : (H1, H2)   |fc2.weight|.T
    b2_ref   : (1, H2)
    w3_ref   : (1, H2)    |fc3.weight| row (final layer done on VPU)
    b3_ref   : (1, 1)     SMEM scalar
    out_ref  : (TB, 1)
    """
    both = se_ref[...]                                    # (2*TB, D)
    tb = both.shape[0] // 2

    # Fused interaction matmul: student and exercise rows share the same RHS,
    # so knowledge_emb is pushed through the MXU once per tile.
    sk = jnp.dot(both, kn_t_ref[...],
                 preferred_element_type=jnp.float32)      # (2*TB, K)
    stat = jax.nn.sigmoid(sk[:tb, :])                     # (TB, K)
    kdiff = jax.nn.sigmoid(sk[tb:, :])                    # (TB, K)

    e_disc = jax.nn.sigmoid(edisc_ref[...])               # (TB, 1)
    x = e_disc * (stat - kdiff) * q_ref[...]              # (TB, K)

    # TODO(synk): nn.Dropout(0.5) layers are identity in eval mode; no RNG here.
    h1 = jnp.tanh(jnp.dot(x, w1_t_ref[...],
                          preferred_element_type=jnp.float32) + b1_ref[...])   # (TB, H1)
    h2 = jnp.tanh(jnp.dot(h1, w2_t_ref[...],
                          preferred_element_type=jnp.float32) + b2_ref[...])   # (TB, H2)

    # Final (H2 -> 1) layer as VPU multiply + cross-lane reduce instead of an
    # N=1 MXU matmul (avoids lighting one output lane + full push/drain).
    logit = jnp.sum(h2 * w3_ref[...], axis=-1, keepdims=True) + b3_ref[0, 0]   # (TB, 1)
    out_ref[...] = jax.nn.sigmoid(logit).astype(out_ref.dtype)


def _pick_batch_tile(B, D, K, H1, H2, budget_bytes):
    """Largest batch tile (multiple of 8, <=512) whose VMEM footprint fits.

    512 is safe on all generations; the auto-shrink loop covers v7x's smaller
    VMEM when K is large (per-tile q/x tiles are TB*K*4 B and double-buffered).
    """
    def est(tb):
        invariant = 2 * 4 * (D * K + K * H1 + H1 * H2 + 2 * H2 + H1)   # resident weights
        io = 2 * 4 * (2 * tb * D + tb * K + 2 * tb)                    # double-buffered tiles
        live = 4 * (3 * tb * K + tb * H1 + tb * H2 + 2 * tb)           # in-kernel temporaries
        return invariant + io + live

    tb = min(512, _round_up(B, 8))
    while tb > 8 and est(tb) > budget_bytes:
        tb = max(8, _round_up(tb // 2, 8))
    return tb


@jax.jit
def kancd_forward(params, stu_id, exer_id, q):
    """Embedding gathers + PosLinear/transpose folding in JAX; dense path in Pallas."""
    f32 = jnp.float32
    stu_e = jnp.take(params["student_emb"], stu_id, axis=0).astype(f32)     # (B, D)
    exer_e = jnp.take(params["exercise_emb"], exer_id, axis=0).astype(f32)  # (B, D)
    e_disc = jnp.take(params["e_disc"], exer_id, axis=0).astype(f32)        # (B, 1)
    q = q.astype(f32)

    B, D = stu_e.shape
    K = q.shape[1]
    H1 = params["fc1_w"].shape[0]
    H2 = params["fc2_w"].shape[0]

    # PosLinear (2*relu(-w)+w == |w|) and all transposes hoisted out of the kernel.
    kn_t = params["knowledge_emb"].astype(f32).T       # (D, K)
    w1_t = jnp.abs(params["fc1_w"]).astype(f32).T      # (K, H1)
    w2_t = jnp.abs(params["fc2_w"]).astype(f32).T      # (H1, H2)
    w3_r = jnp.abs(params["fc3_w"]).astype(f32)        # (1, H2)
    b1 = params["fc1_b"].astype(f32)                   # (1, H1)
    b2 = params["fc2_b"].astype(f32)                   # (1, H2)
    b3 = params["fc3_b"].astype(f32)                   # (1, 1) -> SMEM scalar

    vmem_limit = 48 * 1024 * 1024                      # explicit; safe on v5e/v6e/v7x
    TB = _pick_batch_tile(B, D, K, H1, H2, budget_bytes=40 * 1024 * 1024)
    B_pad = _round_up(B, TB)
    G = B_pad // TB
    pad = B_pad - B

    if pad:
        stu_e = jnp.pad(stu_e, ((0, pad), (0, 0)))
        exer_e = jnp.pad(exer_e, ((0, pad), (0, 0)))
        e_disc = jnp.pad(e_disc, ((0, pad), (0, 0)))
        q = jnp.pad(q, ((0, pad), (0, 0)))

    # Stack student/exercise rows per batch tile so the kernel runs a single
    # (2*TB, D) @ (D, K) interaction matmul per grid step.
    se = jnp.concatenate(
        [stu_e.reshape(G, TB, D), exer_e.reshape(G, TB, D)], axis=1)   # (G, 2*TB, D)

    inv = lambda i: (0, 0)   # grid-invariant weights/biases: stay VMEM-resident

    out = pl.pallas_call(
        kancd_kernel,
        out_shape=jax.ShapeDtypeStruct((B_pad, 1), f32),
        grid=(G,),
        in_specs=[
            pl.BlockSpec((None, 2 * TB, D), lambda i: (i, 0, 0)),   # se (squeezed lead dim)
            pl.BlockSpec((TB, 1), lambda i: (i, 0)),                # e_disc
            pl.BlockSpec((TB, K), lambda i: (i, 0)),                # q
            pl.BlockSpec((D, K), inv),                              # kn_t
            pl.BlockSpec((K, H1), inv),                             # w1_t
            pl.BlockSpec((1, H1), inv),                             # b1
            pl.BlockSpec((H1, H2), inv),                            # w2_t
            pl.BlockSpec((1, H2), inv),                             # b2
            pl.BlockSpec((1, H2), inv),                             # w3 row
            pl.BlockSpec(memory_space=pltpu.MemorySpace.SMEM),      # b3 scalar
        ],
        out_specs=pl.BlockSpec((TB, 1), lambda i: (i, 0)),
        compiler_params=pltpu.CompilerParams(
            dimension_semantics=("parallel",),
            vmem_limit_bytes=vmem_limit,
        ),
    )(se, e_disc, q, kn_t, w1_t, b1, w2_t, b2, w3_r, b3)

    return out[:B, 0]


def _xavier_normal(key, shape):
    fan_out, fan_in = shape[0], shape[1]
    std = (2.0 / (fan_in + fan_out)) ** 0.5
    return std * jax.random.normal(key, shape, dtype=jnp.float32)


def init_params(key, student_num, exercise_num, knowledge_num, emb_dim):
    hid1, hid2 = 256, 128
    ks = jax.random.split(key, 12)
    return {
        "student_emb": _xavier_normal(ks[0], (student_num, emb_dim)),
        "exercise_emb": _xavier_normal(ks[1], (exercise_num, emb_dim)),
        "knowledge_emb": _xavier_normal(ks[2], (knowledge_num, emb_dim)),
        "e_disc": _xavier_normal(ks[3], (exercise_num, 1)),
        "fc1_w": _xavier_normal(ks[4], (hid1, knowledge_num)),
        "fc1_b": 0.01 * jax.random.normal(ks[5], (1, hid1), dtype=jnp.float32),
        "fc2_w": _xavier_normal(ks[6], (hid2, hid1)),
        "fc2_b": 0.01 * jax.random.normal(ks[7], (1, hid2), dtype=jnp.float32),
        "fc3_w": _xavier_normal(ks[8], (1, hid2)),
        "fc3_b": 0.01 * jax.random.normal(ks[9], (1, 1), dtype=jnp.float32),
    }


if __name__ == "__main__":
    key = jax.random.PRNGKey(0)
    student_num, exercise_num, knowledge_num, emb_dim = 20, 30, 32, 16
    batch = 8

    pk, ik = jax.random.split(key)
    params = init_params(pk, student_num, exercise_num, knowledge_num, emb_dim)

    k1, k2, k3 = jax.random.split(ik, 3)
    stu_id = jax.random.randint(k1, (batch,), 0, student_num)
    exer_id = jax.random.randint(k2, (batch,), 0, exercise_num)
    q = (jax.random.uniform(k3, (batch, knowledge_num)) > 0.5).astype(jnp.float32)

    out = kancd_forward(params, stu_id, exer_id, q)
    jax.block_until_ready(out)
    assert out.shape == (batch,)
    print("KERNEL_OK")
</pallas_src>

<mosaic_0001>
module attributes {stable_mosaic.version = 11 : i64} {
  func.func @kancd_kernel(%arg0: i32, %arg1: memref<1x16x16xf32, #tpu.memory_space<vmem>>, %arg2: memref<8x1xf32, #tpu.memory_space<vmem>>, %arg3: memref<8x32xf32, #tpu.memory_space<vmem>>, %arg4: memref<16x32xf32, #tpu.memory_space<vmem>>, %arg5: memref<32x256xf32, #tpu.memory_space<vmem>>, %arg6: memref<1x256xf32, #tpu.memory_space<vmem>>, %arg7: memref<256x128xf32, #tpu.memory_space<vmem>>, %arg8: memref<1x128xf32, #tpu.memory_space<vmem>>, %arg9: memref<1x128xf32, #tpu.memory_space<vmem>>, %arg10: memref<1x1xf32, #tpu.memory_space<smem>>, %arg11: memref<8x1xf32, #tpu.memory_space<vmem>>) attributes {dimension_semantics = [#tpu.dimension_semantics<parallel>], iteration_bounds = array<i64: 1>, scalar_prefetch = 0 : i64, scratch_operands = 0 : i64, tpu.core_type = #tpu.core_type<tc>, window_params = [{transform_indices = @transform_0, window_bounds = array<i64: 1, 16, 16>}, {transform_indices = @transform_1, window_bounds = array<i64: 8, 1>}, {transform_indices = @transform_2, window_bounds = array<i64: 8, 32>}, {pipeline_mode = #tpu.pipeline_mode<synchronous>, transform_indices = @transform_3, window_bounds = array<i64: 16, 32>}, {pipeline_mode = #tpu.pipeline_mode<synchronous>, transform_indices = @transform_4, window_bounds = array<i64: 32, 256>}, {pipeline_mode = #tpu.pipeline_mode<synchronous>, transform_indices = @transform_5, window_bounds = array<i64: 1, 256>}, {pipeline_mode = #tpu.pipeline_mode<synchronous>, transform_indices = @transform_6, window_bounds = array<i64: 256, 128>}, {pipeline_mode = #tpu.pipeline_mode<synchronous>, transform_indices = @transform_7, window_bounds = array<i64: 1, 128>}, {pipeline_mode = #tpu.pipeline_mode<synchronous>, transform_indices = @transform_8, window_bounds = array<i64: 1, 128>}, {transform_indices = @transform_9, window_bounds = array<i64: 1, 1>}, {transform_indices = @transform_10, window_bounds = array<i64: 8, 1>}]} {
    %c0 = arith.constant 0 : index
    %c0_0 = arith.constant 0 : index
    %c0_1 = arith.constant 0 : index
    %0 = vector.load %arg1[%c0, %c0_0, %c0_1] : memref<1x16x16xf32, #tpu.memory_space<vmem>>, vector<1x16x16xf32>
    %1 = vector.shape_cast %0 : vector<1x16x16xf32> to vector<16x16xf32>
    %c0_2 = arith.constant 0 : index
    %c0_3 = arith.constant 0 : index
    %2 = vector.load %arg4[%c0_2, %c0_3] : memref<16x32xf32, #tpu.memory_space<vmem>>, vector<16x32xf32>
    %cst = arith.constant dense<0.000000e+00> : vector<16x32xf32>
    %3 = tpu.matmul %1, %2, %cst {dimension_numbers = #tpu.dot_dimension_numbers<[1], [0], [0], [1], [0, 0, 1, 1], [], []>} : vector<16x16xf32>, vector<16x32xf32>, vector<16x32xf32> -> vector<16x32xf32>
    %4 = vector.extract_strided_slice %3 {offsets = [0, 0], sizes = [8, 32], strides = [1, 1]} : vector<16x32xf32> to vector<8x32xf32>
    %5 = arith.negf %4 : vector<8x32xf32>
    %6 = math.exp %5 : vector<8x32xf32>
    %cst_4 = arith.constant 1.000000e+00 : f32
    %7 = vector.broadcast %cst_4 : f32 to vector<8x32xf32>
    %8 = arith.addf %7, %6 : vector<8x32xf32>
    %9 = arith.divf %7, %8 : vector<8x32xf32>
    %10 = vector.extract_strided_slice %3 {offsets = [8, 0], sizes = [8, 32], strides = [1, 1]} : vector<16x32xf32> to vector<8x32xf32>
    %11 = arith.negf %10 : vector<8x32xf32>
    %12 = math.exp %11 : vector<8x32xf32>
    %cst_5 = arith.constant 1.000000e+00 : f32
    %13 = vector.broadcast %cst_5 : f32 to vector<8x32xf32>
    %14 = arith.addf %13, %12 : vector<8x32xf32>
    %15 = arith.divf %13, %14 : vector<8x32xf32>
    %c0_6 = arith.constant 0 : index
    %c0_7 = arith.constant 0 : index
    %16 = vector.load %arg2[%c0_6, %c0_7] : memref<8x1xf32, #tpu.memory_space<vmem>>, vector<8x1xf32>
    %17 = arith.negf %16 : vector<8x1xf32>
    %18 = math.exp %17 : vector<8x1xf32>
    %cst_8 = arith.constant 1.000000e+00 : f32
    %19 = vector.broadcast %cst_8 : f32 to vector<8x1xf32>
    %20 = arith.addf %19, %18 : vector<8x1xf32>
    %21 = arith.divf %19, %20 : vector<8x1xf32>
    %22 = arith.subf %9, %15 : vector<8x32xf32>
    %23 = vector.broadcast %21 : vector<8x1xf32> to vector<8x32xf32>
    %24 = arith.mulf %23, %22 : vector<8x32xf32>
    %c0_9 = arith.constant 0 : index
    %c0_10 = arith.constant 0 : index
    %25 = vector.load %arg3[%c0_9, %c0_10] : memref<8x32xf32, #tpu.memory_space<vmem>>, vector<8x32xf32>
    %26 = arith.mulf %24, %25 : vector<8x32xf32>
    %c0_11 = arith.constant 0 : index
    %c0_12 = arith.constant 0 : index
    %27 = vector.load %arg5[%c0_11, %c0_12] : memref<32x256xf32, #tpu.memory_space<vmem>>, vector<32x256xf32>
    %cst_13 = arith.constant dense<0.000000e+00> : vector<8x256xf32>
    %28 = tpu.matmul %26, %27, %cst_13 {dimension_numbers = #tpu.dot_dimension_numbers<[1], [0], [0], [1], [0, 0, 1, 1], [], []>} : vector<8x32xf32>, vector<32x256xf32>, vector<8x256xf32> -> vector<8x256xf32>
    %c0_14 = arith.constant 0 : index
    %c0_15 = arith.constant 0 : index
    %29 = vector.load %arg6[%c0_14, %c0_15] : memref<1x256xf32, #tpu.memory_space<vmem>>, vector<1x256xf32>
    %30 = vector.broadcast %29 : vector<1x256xf32> to vector<8x256xf32>
    %31 = arith.addf %28, %30 : vector<8x256xf32>
    %32 = math.tanh %31 : vector<8x256xf32>
    %c0_16 = arith.constant 0 : index
    %c0_17 = arith.constant 0 : index
    %33 = vector.load %arg7[%c0_16, %c0_17] : memref<256x128xf32, #tpu.memory_space<vmem>>, vector<256x128xf32>
    %cst_18 = arith.constant dense<0.000000e+00> : vector<8x128xf32>
    %34 = tpu.matmul %32, %33, %cst_18 {dimension_numbers = #tpu.dot_dimension_numbers<[1], [0], [0], [1], [0, 0, 1, 1], [], []>} : vector<8x256xf32>, vector<256x128xf32>, vector<8x128xf32> -> vector<8x128xf32>
    %c0_19 = arith.constant 0 : index
    %c0_20 = arith.constant 0 : index
    %35 = vector.load %arg8[%c0_19, %c0_20] : memref<1x128xf32, #tpu.memory_space<vmem>>, vector<1x128xf32>
    %36 = vector.broadcast %35 : vector<1x128xf32> to vector<8x128xf32>
    %37 = arith.addf %34, %36 : vector<8x128xf32>
    %38 = math.tanh %37 : vector<8x128xf32>
    %c0_21 = arith.constant 0 : index
    %c0_22 = arith.constant 0 : index
    %39 = vector.load %arg9[%c0_21, %c0_22] : memref<1x128xf32, #tpu.memory_space<vmem>>, vector<1x128xf32>
    %40 = vector.broadcast %39 : vector<1x128xf32> to vector<8x128xf32>
    %41 = arith.mulf %38, %40 : vector<8x128xf32>
    %cst_23 = arith.constant dense<0.000000e+00> : vector<8xf32>
    %42 = vector.multi_reduction <add>, %41, %cst_23 [1] : vector<8x128xf32> to vector<8xf32>
    %43 = vector.shape_cast %42 : vector<8xf32> to vector<8x1xf32>
    %c0_24 = arith.constant 0 : index
    %c0_25 = arith.constant 0 : index
    %44 = memref.load %arg10[%c0_24, %c0_25] : memref<1x1xf32, #tpu.memory_space<smem>>
    %45 = vector.broadcast %44 : f32 to vector<8x1xf32>
    %46 = arith.addf %43, %45 : vector<8x1xf32>
    %47 = arith.negf %46 : vector<8x1xf32>
    %48 = math.exp %47 : vector<8x1xf32>
    %cst_26 = arith.constant 1.000000e+00 : f32
    %49 = vector.broadcast %cst_26 : f32 to vector<8x1xf32>
    %50 = arith.addf %49, %48 : vector<8x1xf32>
    %51 = arith.divf %49, %50 : vector<8x1xf32>
    %c0_27 = arith.constant 0 : index
    %c0_28 = arith.constant 0 : index
    %52 = vector.load %arg11[%c0_27, %c0_28] : memref<8x1xf32, #tpu.memory_space<vmem>>, vector<8x1xf32>
    tpu.vector_store %arg11[%c0_27, %c0_28], %51 {strides = array<i32>} : memref<8x1xf32, #tpu.memory_space<vmem>>, vector<8x1xf32>,
    return
  }
  func.func @transform_0(%arg0: i32) -> (i32, i32, i32) {
    %c0_i32 = arith.constant 0 : i32
    %c0_i32_0 = arith.constant 0 : i32
    %c0_i32_1 = arith.constant 0 : i32
    return %arg0, %c0_i32, %c0_i32_0 : i32, i32, i32
  }
  func.func @transform_1(%arg0: i32) -> (i32, i32) {
    %c0_i32 = arith.constant 0 : i32
    %c0_i32_0 = arith.constant 0 : i32
    return %arg0, %c0_i32 : i32, i32
  }
  func.func @transform_2(%arg0: i32) -> (i32, i32) {
    %c0_i32 = arith.constant 0 : i32
    %c0_i32_0 = arith.constant 0 : i32
    return %arg0, %c0_i32 : i32, i32
  }
  func.func @transform_3(%arg0: i32) -> (i32, i32) {
    %c0_i32 = arith.constant 0 : i32
    %c0_i32_0 = arith.constant 0 : i32
    %c0_i32_1 = arith.constant 0 : i32
    return %c0_i32, %c0_i32_0 : i32, i32
  }
  func.func @transform_4(%arg0: i32) -> (i32, i32) {
    %c0_i32 = arith.constant 0 : i32
    %c0_i32_0 = arith.constant 0 : i32
    %c0_i32_1 = arith.constant 0 : i32
    return %c0_i32, %c0_i32_0 : i32, i32
  }
  func.func @transform_5(%arg0: i32) -> (i32, i32) {
    %c0_i32 = arith.constant 0 : i32
    %c0_i32_0 = arith.constant 0 : i32
    %c0_i32_1 = arith.constant 0 : i32
    return %c0_i32, %c0_i32_0 : i32, i32
  }
  func.func @transform_6(%arg0: i32) -> (i32, i32) {
    %c0_i32 = arith.constant 0 : i32
    %c0_i32_0 = arith.constant 0 : i32
    %c0_i32_1 = arith.constant 0 : i32
    return %c0_i32, %c0_i32_0 : i32, i32
  }
  func.func @transform_7(%arg0: i32) -> (i32, i32) {
    %c0_i32 = arith.constant 0 : i32
    %c0_i32_0 = arith.constant 0 : i32
    %c0_i32_1 = arith.constant 0 : i32
    return %c0_i32, %c0_i32_0 : i32, i32
  }
  func.func @transform_8(%arg0: i32) -> (i32, i32) {
    %c0_i32 = arith.constant 0 : i32
    %c0_i32_0 = arith.constant 0 : i32
    %c0_i32_1 = arith.constant 0 : i32
    return %c0_i32, %c0_i32_0 : i32, i32
  }
  func.func @transform_9(%arg0: i32) -> (i32, i32) {
    %c0_i32 = arith.constant 0 : i32
    %c0_i32_0 = arith.constant 0 : i32
    %c0_i32_1 = arith.constant 0 : i32
    return %c0_i32, %c0_i32_0 : i32, i32
  }
  func.func @transform_10(%arg0: i32) -> (i32, i32) {
    %c0_i32 = arith.constant 0 : i32
    %c0_i32_0 = arith.constant 0 : i32
    return %arg0, %c0_i32 : i32, i32
  }
}

</mosaic_0001>

<llo_original>
// kernel: kancd_forward.1
$region0: #{kancd_forward.1}
  #allocation0 [shape = 'u32[]', space=smem, size = 0x4, offset = 0x4, fixed_abs, tag = 'smem constant byte address 0x4 - core index']
  #allocation1 [shape = 'u32[144,128]{1,0:T(1,128)}', space=vmem, size = 0x12000, scoped, tag = 'internal scratch']
  #allocation2 [shape = 'f32[1,1]{1,0:T(1,128)S(6)}', space=smem, size = 0x200, scoped, tag = 'scoped memory for kancd_forward.1']
  %s0 = inlined_call_operand.vmem [shape: f32[1,16,16], index: 0, kind: input, shape index: {}]
  %s1 = inlined_call_operand.vmem [shape: f32[8,1], index: 1, kind: input, shape index: {}]
  %s2 = inlined_call_operand.vmem [shape: f32[8,32], index: 2, kind: input, shape index: {}]
  %s3 = inlined_call_operand.vmem [shape: f32[16,32], index: 3, kind: input, shape index: {}]
  %s4 = inlined_call_operand.vmem [shape: f32[32,256], index: 4, kind: input, shape index: {}]
  %s5 = inlined_call_operand.vmem [shape: f32[1,256], index: 5, kind: input, shape index: {}]
  %s6 = inlined_call_operand.vmem [shape: f32[256,128], index: 6, kind: input, shape index: {}]
  %s7 = inlined_call_operand.vmem [shape: f32[1,128], index: 7, kind: input, shape index: {}]
  %s8 = inlined_call_operand.vmem [shape: f32[1,128], index: 8, kind: input, shape index: {}]
  %s9 = inlined_call_operand.<no memory space> [shape: f32[1,1], index: 9, kind: input, shape index: {}]
  %s10 = inlined_call_operand.vmem [shape: f32[8,1], index: 10, kind: output, shape index: {}]
  %s11 = sld [smem:[#allocation0]]
  $region50: #{kancd_forward.1} parent=0
    _
  %s13 = ssub.s32 1, %s11
  %s14 = scalar_select 0, %s13, %s11
  %15 = sst [smem:[#allocation2]] %s9
  // Predicated region
  $region2: #{kancd_forward.1} parent=0 // pred_check
    _
  $region3: #{kancd_forward.1} parent=0 // pred_check_branch
    %17 = sbr.rel (0) target = $region5
  $region4: #{kancd_forward.1} parent=0 // pred_region
    _
  $region5: #{kancd_forward.1} parent=0 // pred_fallthru
    _
  // Predicated region
  $region6: #{kancd_forward.1} parent=0 // pred_check
    _
  $region7: #{kancd_forward.1} parent=0 // pred_check_branch
    %19 = sbr.rel (0) target = $region9
  $region8: #{kancd_forward.1} parent=0 // pred_region
    _
  $region9: #{kancd_forward.1} parent=0 // pred_fallthru
    _
  // Predicated region
  $region10: #{kancd_forward.1} parent=0 // pred_check
    _
  $region11: #{kancd_forward.1} parent=0 // pred_check_branch
    %21 = sbr.rel (0) target = $region13
  $region12: #{kancd_forward.1} parent=0 // pred_region
    _
  $region13: #{kancd_forward.1} parent=0 // pred_fallthru
    _
  // Predicated region
  $region14: #{kancd_forward.1} parent=0 // pred_check
    _
  $region15: #{kancd_forward.1} parent=0 // pred_check_branch
    %23 = sbr.rel (0) target = $region17
  $region16: #{kancd_forward.1} parent=0 // pred_region
    _
  $region17: #{kancd_forward.1} parent=0 // pred_fallthru
    _
  // Predicated region
  $region18: #{kancd_forward.1} parent=0 // pred_check
    _
  $region19: #{kancd_forward.1} parent=0 // pred_check_branch
    %25 = sbr.rel (0) target = $region21
  $region20: #{kancd_forward.1} parent=0 // pred_region
    _
  $region21: #{kancd_forward.1} parent=0 // pred_fallthru
    _
  // Predicated region
  $region22: #{kancd_forward.1} parent=0 // pred_check
    _
  $region23: #{kancd_forward.1} parent=0 // pred_check_branch
    %27 = sbr.rel (0) target = $region25
  $region24: #{kancd_forward.1} parent=0 // pred_region
    _
  $region25: #{kancd_forward.1} parent=0 // pred_fallthru
    _
  // Predicated region
  $region26: #{kancd_forward.1} parent=0 // pred_check
    _
  $region27: #{kancd_forward.1} parent=0 // pred_check_branch
    %29 = sbr.rel (0) target = $region29
  $region28: #{kancd_forward.1} parent=0 // pred_region
    _
  $region29: #{kancd_forward.1} parent=0 // pred_fallthru
    _
  // Predicated region
  $region30: #{kancd_forward.1} parent=0 // pred_check
    _
  $region31: #{kancd_forward.1} parent=0 // pred_check_branch
    %31 = sbr.rel (0) target = $region33
  $region32: #{kancd_forward.1} parent=0 // pred_region
    _
  $region33: #{kancd_forward.1} parent=0 // pred_fallthru
    _
  // Predicated region
  $region34: #{kancd_forward.1} parent=0 // pred_check
    _
  $region35: #{kancd_forward.1} parent=0 // pred_check_branch
    %33 = sbr.rel (0) target = $region37
  $region36: #{kancd_forward.1} parent=0 // pred_region
    _
  $region37: #{kancd_forward.1} parent=0 // pred_fallthru
    _
  // Predicated region
  $region38: #{kancd_forward.1} parent=0 // pred_check
    _
  $region39: #{kancd_forward.1} parent=0 // pred_check_branch
    %35 = sbr.rel (0) target = $region41
  $region40: #{kancd_forward.1} parent=0 // pred_region
    _
  $region41: #{kancd_forward.1} parent=0 // pred_fallthru
    _
  %v36 = vld [vmem:[%s0] sm:$0xff]
  %v37 = vld [vmem:[%s0 + $0x8] sm:$0xff]
  %v38 = vld [vmem:[%s3] sm:$0xff]
  %v39 = vld [vmem:[%s3 + $0x8] sm:$0xff]
  %vm40 = vcmask 130048
  %v42 = vsel %vm40, %v36, 0
  %v45 = vsel %vm40, %v37, 0
  %47 = vmatprep.subr.mxu0 0.0
  %48 = vmatpush1.msra.mxu0 %v38
  %49 = vmatprep.subr.mxu0 0.0
  %50 = vmatpush1.msra.mxu0 %v39
  %51 = vmatprep.subr.mxu0 0.0
  %52 = vmatpush1.msra.mxu0 0.0
  %53 = vmatprep.subr.mxu0 0.0
  %54 = vmatpush1.msra.mxu0 0.0
  %55 = vmatprep.subr.mxu0 0.0
  %56 = vmatpush1.msra.mxu0 0.0
  %57 = vmatprep.subr.mxu0 0.0
  %58 = vmatpush1.msra.mxu0 0.0
  %59 = vmatprep.subr.mxu0 0.0
  %60 = vmatpush1.msra.mxu0 0.0
  %61 = vmatprep.subr.mxu0 0.0
  %62 = vmatpush1.msra.mxu0 0.0
  %63 = vmatprep.subr.mxu0 0.0
  %64 = vmatpush1.msra.mxu0 0.0
  %65 = vmatprep.subr.mxu0 0.0
  %66 = vmatpush1.msra.mxu0 0.0
  %67 = vmatprep.subr.mxu0 0.0
  %68 = vmatpush1.msra.mxu0 0.0
  %69 = vmatprep.subr.mxu0 0.0
  %70 = vmatpush1.msra.mxu0 0.0
  %71 = vmatprep.subr.mxu0 0.0
  %72 = vmatpush1.msra.mxu0 0.0
  %73 = vmatprep.subr.mxu0 0.0
  %74 = vmatpush1.msra.mxu0 0.0
  %75 = vmatprep.subr.mxu0 0.0
  %76 = vmatpush1.msra.mxu0 0.0
  %77 = vmatprep.subr.mxu0 0.0
  %78 = vmatpush1.msra.mxu0 0.0
  %79 = vmatprep.subr.mxu0 0.0
  %80 = vmatpush1.msra.mxu0 0.0
  %81 = vmatprep.subr.mxu0 0.0
  %82 = vmatpush1.msra.mxu0 0.0
  %83 = vmatprep.subr.mxu0 0.0
  %84 = vmatpush1.msra.mxu0 0.0
  %85 = vmatprep.subr.mxu0 0.0
  %86 = vmatpush1.msra.mxu0 0.0
  %87 = vmatprep.subr.mxu0 0.0
  %88 = vmatpush1.msra.mxu0 0.0
  %89 = vmatprep.subr.mxu0 0.0
  %90 = vmatpush1.msra.mxu0 0.0
  %91 = vmatprep.subr.mxu0 0.0
  %92 = vmatpush1.msra.mxu0 0.0
  %93 = vmatprep.subr.mxu0 0.0
  %94 = vmatpush1.msra.mxu0 0.0
  %95 = vmatprep.subr.mxu0 0.0
  %96 = vmatpush1.msra.mxu0 0.0
  %97 = vmatprep.subr.mxu0 0.0
  %98 = vmatpush1.msra.mxu0 0.0
  %99 = vmatprep.subr.mxu0 0.0
  %100 = vmatpush1.msra.mxu0 0.0
  %101 = vmatprep.subr.mxu0 0.0
  %102 = vmatpush1.msra.mxu0 0.0
  %103 = vmatprep.subr.mxu0 0.0
  %104 = vmatpush1.msra.mxu0 0.0
  %105 = vmatprep.subr.mxu0 0.0
  %106 = vmatpush1.msra.mxu0 0.0
  %107 = vmatprep.subr.mxu0 0.0
  %108 = vmatpush1.msra.mxu0 0.0
  %109 = vmatprep.subr.mxu0 0.0
  %110 = vmatpush1.msra.mxu0 0.0
  %111 = vmatprep.mubr.f32.mxu0 0.0
  %112 = vmatmul.mubr.f32.gmra.mrb[0].mxu0 %v42
  %v113 = vpop.f32.mrb[0].mxu0
  %v114 = vadd.f32 0.0, %v113
  %v115 = vpop.f32.mrb[0].mxu0
  %116 = vmatprep.mubr.f32.mxu0 0.0
  %117 = vmatmul.mubr.f32.gmra.mrb[0].mxu0 %v45
  %v118 = vpop.f32.mrb[0].mxu0
  %v119 = vadd.f32 0.0, %v118
  %v120 = vpop.f32.mrb[0].mxu0
  %121 = vdwg.mxu0
  %v122 = vxor.u32 %v114, 2147483648
  %v123 = vmul.f32 %v122, 1.442695
  %v124 = vpow.pop %v123
  %v125 = vadd.f32 %v124, 1.0
  %v126 = vrcp.pop %v125
  %v127 = vmul.f32 1.0, %v126
  %v128 = vxor.u32 %v119, 2147483648
  %v129 = vmul.f32 %v128, 1.442695
  %v130 = vpow.pop %v129
  %v131 = vadd.f32 %v130, 1.0
  %v132 = vrcp.pop %v131
  %v133 = vmul.f32 1.0, %v132
  %v134 = vld [vmem:[%s1] sm:$0xff]
  %v135 = vxor.u32 %v134, 2147483648
  %v136 = vmul.f32 %v135, 1.442695
  %v137 = vpow.pop %v136
  %v138 = vadd.f32 %v137, 1.0
  %v139 = vrcp.pop %v138
  %v140 = vmul.f32 1.0, %v139
  %v141 = vsub.f32 %v127, %v133
  %143 = vset.pattern.permute.xlu0 0
  %144 = vperm.xlu0 %143, %v140
  %v145 = vpop.permute.xlu0 %144
  %v147 = vmul.f32 %v145, %v141
  %v148 = vld [vmem:[%s2] sm:$0xff]
  %v149 = vmul.f32 %v147, %v148
  %v150 = vld [vmem:[%s4] sm:$0xff]
  %v151 = vld [vmem:[%s4 + $0x8] sm:$0xff]
  %v152 = vld [vmem:[%s4 + $0x10] sm:$0xff]
  %v153 = vld [vmem:[%s4 + $0x18] sm:$0xff]
  %v154 = vld [vmem:[%s4 + $0x20] sm:$0xff]
  %v155 = vld [vmem:[%s4 + $0x28] sm:$0xff]
  %v156 = vld [vmem:[%s4 + $0x30] sm:$0xff]
  %v157 = vld [vmem:[%s4 + $0x38] sm:$0xff]
  %v158 = vld [vmem:[%s5] sm:$0x3]
  %v160 = vlaneseq
  %v161 = vshrl.u32 %v160, 7
  %v162 = vsub.s32 0, %v161
  %v163 = vrot.slane %v158, %v162
  %v164 = vlaneseq
  %v165 = vshrl.u32 %v164, 7
  %v166 = vsub.s32 1, %v165
  %v167 = vrot.slane %v158, %v166
  %vm170 = vcmask 261120
  %v172 = vsel %vm170, %v149, 0
  %174 = vmatprep.subr.mxu0 %v151
  %175 = vmatpush1.msra.mxu0 %v150
  %176 = vmatprep.subr.mxu0 %v153
  %177 = vmatpush1.msra.mxu0 %v152
  %178 = vmatprep.subr.mxu0 %v155
  %179 = vmatpush1.msra.mxu0 %v154
  %180 = vmatprep.subr.mxu0 %v157
  %181 = vmatpush1.msra.mxu0 %v156
  %182 = vmatprep.subr.mxu0 0.0
  %183 = vmatpush1.msra.mxu0 0.0
  %184 = vmatprep.subr.mxu0 0.0
  %185 = vmatpush1.msra.mxu0 0.0
  %186 = vmatprep.subr.mxu0 0.0
  %187 = vmatpush1.msra.mxu0 0.0
  %188 = vmatprep.subr.mxu0 0.0
  %189 = vmatpush1.msra.mxu0 0.0
  %190 = vmatprep.subr.mxu0 0.0
  %191 = vmatpush1.msra.mxu0 0.0
  %192 = vmatprep.subr.mxu0 0.0
  %193 = vmatpush1.msra.mxu0 0.0
  %194 = vmatprep.subr.mxu0 0.0
  %195 = vmatpush1.msra.mxu0 0.0
  %196 = vmatprep.subr.mxu0 0.0
  %197 = vmatpush1.msra.mxu0 0.0
  %198 = vmatprep.subr.mxu0 0.0
  %199 = vmatpush1.msra.mxu0 0.0
  %200 = vmatprep.subr.mxu0 0.0
  %201 = vmatpush1.msra.mxu0 0.0
  %202 = vmatprep.subr.mxu0 0.0
  %203 = vmatpush1.msra.mxu0 0.0
  %204 = vmatprep.subr.mxu0 0.0
  %205 = vmatpush1.msra.mxu0 0.0
  %206 = vmatprep.subr.mxu0 0.0
  %207 = vmatpush1.msra.mxu0 0.0
  %208 = vmatprep.subr.mxu0 0.0
  %209 = vmatpush1.msra.mxu0 0.0
  %210 = vmatprep.subr.mxu0 0.0
  %211 = vmatpush1.msra.mxu0 0.0
  %212 = vmatprep.subr.mxu0 0.0
  %213 = vmatpush1.msra.mxu0 0.0
  %214 = vmatprep.subr.mxu0 0.0
  %215 = vmatpush1.msra.mxu0 0.0
  %216 = vmatprep.subr.mxu0 0.0
  %217 = vmatpush1.msra.mxu0 0.0
  %218 = vmatprep.subr.mxu0 0.0
  %219 = vmatpush1.msra.mxu0 0.0
  %220 = vmatprep.subr.mxu0 0.0
  %221 = vmatpush1.msra.mxu0 0.0
  %222 = vmatprep.subr.mxu0 0.0
  %223 = vmatpush1.msra.mxu0 0.0
  %224 = vmatprep.subr.mxu0 0.0
  %225 = vmatpush1.msra.mxu0 0.0
  %226 = vmatprep.subr.mxu0 0.0
  %227 = vmatpush1.msra.mxu0 0.0
  %228 = vmatprep.subr.mxu0 0.0
  %229 = vmatpush1.msra.mxu0 0.0
  %230 = vmatprep.subr.mxu0 0.0
  %231 = vmatpush1.msra.mxu0 0.0
  %232 = vmatprep.subr.mxu0 0.0
  %233 = vmatpush1.msra.mxu0 0.0
  %234 = vmatprep.subr.mxu0 0.0
  %235 = vmatpush1.msra.mxu0 0.0
  %236 = vmatprep.subr.mxu0 0.0
  %237 = vmatpush1.msra.mxu0 0.0
  %238 = vmatprep.mubr.f32.mxu0 0.0
  %239 = vmatmul.mubr.f32.gmra.mrb[0].mxu0 %v172
  %v240 = vpop.f32.mrb[0].mxu0
  %v241 = vadd.f32 %v163, %v240
  %v242 = vpop.f32.mrb[0].mxu0
  %v243 = vadd.f32 %v167, %v242
  %244 = vdwg.mxu0
  %v245 = vtanh.pop %v241
  %v246 = vtanh.pop %v243
  %v247 = vld [vmem:[%s6] sm:$0xff]
  %v248 = vld [vmem:[%s6 + $0x8] sm:$0xff]
  %v249 = vld [vmem:[%s6 + $0x10] sm:$0xff]
  %v250 = vld [vmem:[%s6 + $0x18] sm:$0xff]
  %v251 = vld [vmem:[%s6 + $0x20] sm:$0xff]
  %v252 = vld [vmem:[%s6 + $0x28] sm:$0xff]
  %v253 = vld [vmem:[%s6 + $0x30] sm:$0xff]
  %v254 = vld [vmem:[%s6 + $0x38] sm:$0xff]
  %v255 = vld [vmem:[%s6 + $0x40] sm:$0xff]
  %v256 = vld [vmem:[%s6 + $0x48] sm:$0xff]
  %v257 = vld [vmem:[%s6 + $0x50] sm:$0xff]
  %v258 = vld [vmem:[%s6 + $0x58] sm:$0xff]
  %v259 = vld [vmem:[%s6 + $0x60] sm:$0xff]
  %v260 = vld [vmem:[%s6 + $0x68] sm:$0xff]
  %v261 = vld [vmem:[%s6 + $0x70] sm:$0xff]
  %v262 = vld [vmem:[%s6 + $0x78] sm:$0xff]
  %v263 = vld [vmem:[%s6 + $0x80] sm:$0xff]
  %v264 = vld [vmem:[%s6 + $0x88] sm:$0xff]
  %v265 = vld [vmem:[%s6 + $0x90] sm:$0xff]
  %v266 = vld [vmem:[%s6 + $0x98] sm:$0xff]
  %v267 = vld [vmem:[%s6 + $0xa0] sm:$0xff]
  %v268 = vld [vmem:[%s6 + $0xa8] sm:$0xff]
  %v269 = vld [vmem:[%s6 + $0xb0] sm:$0xff]
  %v270 = vld [vmem:[%s6 + $0xb8] sm:$0xff]
  %v271 = vld [vmem:[%s6 + $0xc0] sm:$0xff]
  %v272 = vld [vmem:[%s6 + $0xc8] sm:$0xff]
  %v273 = vld [vmem:[%s6 + $0xd0] sm:$0xff]
  %v274 = vld [vmem:[%s6 + $0xd8] sm:$0xff]
  %v275 = vld [vmem:[%s6 + $0xe0] sm:$0xff]
  %v276 = vld [vmem:[%s6 + $0xe8] sm:$0xff]
  %v277 = vld [vmem:[%s6 + $0xf0] sm:$0xff]
  %v278 = vld [vmem:[%s6 + $0xf8] sm:$0xff]
  %v279 = vld [vmem:[%s7] sm:$0x1]
  %v281 = vlaneseq
  %v282 = vshrl.u32 %v281, 7
  %v283 = vsub.s32 0, %v282
  %v284 = vrot.slane %v279, %v283
  %286 = vmatprep.subr.mxu0 0.0
  %287 = vmatpush1.msra.mxu0 %v247
  %288 = vmatprep.subr.mxu0 0.0
  %289 = vmatpush1.msra.mxu0 %v248
  %290 = vmatprep.subr.mxu0 0.0
  %291 = vmatpush1.msra.mxu0 %v249
  %292 = vmatprep.subr.mxu0 0.0
  %293 = vmatpush1.msra.mxu0 %v250
  %294 = vmatprep.subr.mxu0 0.0
  %295 = vmatpush1.msra.mxu0 %v251
  %296 = vmatprep.subr.mxu0 0.0
  %297 = vmatpush1.msra.mxu0 %v252
  %298 = vmatprep.subr.mxu0 0.0
  %299 = vmatpush1.msra.mxu0 %v253
  %300 = vmatprep.subr.mxu0 0.0
  %301 = vmatpush1.msra.mxu0 %v254
  %302 = vmatprep.subr.mxu0 0.0
  %303 = vmatpush1.msra.mxu0 %v255
  %304 = vmatprep.subr.mxu0 0.0
  %305 = vmatpush1.msra.mxu0 %v256
  %306 = vmatprep.subr.mxu0 0.0
  %307 = vmatpush1.msra.mxu0 %v257
  %308 = vmatprep.subr.mxu0 0.0
  %309 = vmatpush1.msra.mxu0 %v258
  %310 = vmatprep.subr.mxu0 0.0
  %311 = vmatpush1.msra.mxu0 %v259
  %312 = vmatprep.subr.mxu0 0.0
  %313 = vmatpush1.msra.mxu0 %v260
  %314 = vmatprep.subr.mxu0 0.0
  %315 = vmatpush1.msra.mxu0 %v261
  %316 = vmatprep.subr.mxu0 0.0
  %317 = vmatpush1.msra.mxu0 %v262
  %318 = vmatprep.subr.mxu0 0.0
  %319 = vmatpush1.msra.mxu0 %v263
  %320 = vmatprep.subr.mxu0 0.0
  %321 = vmatpush1.msra.mxu0 %v264
  %322 = vmatprep.subr.mxu0 0.0
  %323 = vmatpush1.msra.mxu0 %v265
  %324 = vmatprep.subr.mxu0 0.0
  %325 = vmatpush1.msra.mxu0 %v266
  %326 = vmatprep.subr.mxu0 0.0
  %327 = vmatpush1.msra.mxu0 %v267
  %328 = vmatprep.subr.mxu0 0.0
  %329 = vmatpush1.msra.mxu0 %v268
  %330 = vmatprep.subr.mxu0 0.0
  %331 = vmatpush1.msra.mxu0 %v269
  %332 = vmatprep.subr.mxu0 0.0
  %333 = vmatpush1.msra.mxu0 %v270
  %334 = vmatprep.subr.mxu0 0.0
  %335 = vmatpush1.msra.mxu0 %v271
  %336 = vmatprep.subr.mxu0 0.0
  %337 = vmatpush1.msra.mxu0 %v272
  %338 = vmatprep.subr.mxu0 0.0
  %339 = vmatpush1.msra.mxu0 %v273
  %340 = vmatprep.subr.mxu0 0.0
  %341 = vmatpush1.msra.mxu0 %v274
  %342 = vmatprep.subr.mxu0 0.0
  %343 = vmatpush1.msra.mxu0 %v275
  %344 = vmatprep.subr.mxu0 0.0
  %345 = vmatpush1.msra.mxu0 %v276
  %346 = vmatprep.subr.mxu0 0.0
  %347 = vmatpush1.msra.mxu0 %v277
  %348 = vmatprep.subr.mxu0 0.0
  %349 = vmatpush1.msra.mxu0 %v278
  %350 = vmatprep.mubr.f32.mxu0 %v246
  %351 = vmatmul.mubr.f32.gmra.mrb[0].mxu0 %v245
  %v352 = vpop.f32.mrb[0].mxu0
  %v353 = vadd.f32 %v284, %v352
  %v354 = vpop.f32.mrb[0].mxu0
  %355 = vdwg.mxu0
  %v356 = vtanh.pop %v353
  %v357 = vld [vmem:[%s8] sm:$0x1]
  %v359 = vlaneseq
  %v360 = vshrl.u32 %v359, 7
  %v361 = vsub.s32 0, %v360
  %v362 = vrot.slane %v357, %v361
  %v364 = vmul.f32 %v356, %v362
  %365 = vadd.xlane.f32.xlu0 %v364
  %v366 = vpop.xlane.xlu0 %365
  %s367 = sld [smem:[#allocation2]]
  %v368 = vstv %s367
  %v369 = vadd.f32 %v366, %v368
  %v370 = vxor.u32 %v369, 2147483648
  %v371 = vmul.f32 %v370, 1.442695
  %v372 = vpow.pop %v371
  %v373 = vadd.f32 %v372, 1.0
  %v374 = vrcp.pop %v373
  %v375 = vmul.f32 1.0, %v374
  %vm376 = vcmask 7168
  %377 = vst.msk [vmem:[%s10] sm:$0xff] %vm376, %v375
  // Predicated region
  $region42: #{kancd_forward.1} parent=0 // pred_check
    _
  $region43: #{kancd_forward.1} parent=0 // pred_check_branch
    %379 = sbr.rel (0) target = $region45
  $region44: #{kancd_forward.1} parent=0 // pred_region
    _
  $region45: #{kancd_forward.1} parent=0 // pred_fallthru
    _
  // Predicated region
  $region46: #{kancd_forward.1} parent=0 // pred_check
    _
  $region47: #{kancd_forward.1} parent=0 // pred_check_branch
    %381 = sbr.rel (0) target = $region49
  $region48: #{kancd_forward.1} parent=0 // pred_region
    _
  $region49: #{kancd_forward.1} parent=0 // pred_fallthru
    _

</llo_original>
